<compile_context>
chip_gen: v7x
topology: tpu7x:2x2x1
jax: 0.10.0
libtpu: 0.0.40
codegen_flags: <defaults>
</compile_context>

<pallas_src>
import functools

import numpy as np
import jax
import jax.numpy as jnp
from jax.experimental import pallas as pl
from jax.experimental.pallas import tpu as pltpu


# ---------------------------------------------------------------------------
# kernels
# ---------------------------------------------------------------------------
def _fill_padded(x_ref, xp_ref, p0, p1, hc, wc, hp, wp):
    """Zero only the thin padding borders, then drop the input block in."""
    c = xp_ref.shape[0]
    dt = xp_ref.dtype
    if p0 > 0:
        xp_ref[:, 0:p0, :] = jnp.zeros((c, p0, wp), dt)
        xp_ref[:, :, 0:p0] = jnp.zeros((c, hp, p0), dt)
    if p1 > 0:
        xp_ref[:, p0 + hc:hp, :] = jnp.zeros((c, p1, wp), dt)
        xp_ref[:, :, p0 + wc:wp] = jnp.zeros((c, hp, p1), dt)
    xp_ref[:, p0:p0 + hc, p0:p0 + wc] = x_ref[...]


def _blur_sep_kernel(x_ref, o_ref, xp_ref, v_ref, *, taps_y, taps_x,
                     p0, p1, hc, wc, hp, wp, ho, wo):
    # x_ref : (c_blk, hc, wc)  input block (input dtype)
    # o_ref : (c_blk, ho, wo)  output block (input dtype)
    # xp_ref: (c_blk, hp, wp)  zero-padded copy of the block (input dtype)
    # v_ref : (c_blk, ho, wp)  f32 vertical-pass intermediate
    _fill_padded(x_ref, xp_ref, p0, p1, hc, wc, hp, wp)

    # Vertical FIR first (sublane-offset reads); f32 accumulate into explicit scratch.
    acc = xp_ref[:, 0:ho, :].astype(jnp.float32) * taps_y[0]
    for ky in range(1, len(taps_y)):
        if taps_y[ky] != 0.0:
            acc = acc + xp_ref[:, ky:ky + ho, :].astype(jnp.float32) * taps_y[ky]
    v_ref[...] = acc

    # Horizontal FIR (lane-offset reads) on the smaller (ho, wp) intermediate.
    out = v_ref[:, :, 0:wo] * taps_x[0]
    for kx in range(1, len(taps_x)):
        if taps_x[kx] != 0.0:
            out = out + v_ref[:, :, kx:kx + wo] * taps_x[kx]
    o_ref[...] = out.astype(o_ref.dtype)


def _blur_2d_kernel(x_ref, o_ref, xp_ref, *, taps,
                    p0, p1, hc, wc, hp, wp, ho, wo):
    # Non-separable fallback (2-D tap matrix supplied directly).
    _fill_padded(x_ref, xp_ref, p0, p1, hc, wc, hp, wp)
    acc = None
    for ky in range(len(taps)):
        for kx in range(len(taps[0])):
            t = taps[ky][kx]
            if t == 0.0 and acc is not None:
                continue
            term = xp_ref[:, ky:ky + ho, kx:kx + wo].astype(jnp.float32) * t
            acc = term if acc is None else acc + term
    o_ref[...] = acc.astype(o_ref.dtype)


# ---------------------------------------------------------------------------
# wrapper
# ---------------------------------------------------------------------------
def _vmem_capacity_bytes():
    try:
        info = pltpu.get_tpu_info()
        cap = getattr(info, "vmem_capacity_bytes", None)
        if cap:
            return int(cap)
    except Exception:
        pass
    return 64 * 1024 * 1024   # conservative: v7x per-TensorCore VMEM


def blur(x, kernel, pad, upsample_factor=1):
    """Pallas equivalent of Blur(kernel, pad, upsample_factor)(x), x in NCHW."""
    pad0, pad1 = int(pad[0]), int(pad[1])
    n, c, h, w = x.shape
    in_dt = x.dtype

    # --- compile-time taps (flipped -> true convolution, as in upfirdn2d) ---
    k_np = np.asarray(kernel, dtype=np.float32)
    separable = (k_np.ndim == 1)
    if separable:
        s = float(k_np.sum())
        t1 = np.flip(k_np).astype(np.float64) / s * float(upsample_factor)
        taps_y = tuple(float(v) for v in t1)
        taps_x = taps_y
        kh = kw = int(k_np.shape[0])
    else:
        k2 = (k_np / k_np.sum()) * float(upsample_factor) ** 2
        k2 = np.flip(k2, axis=(0, 1)).astype(np.float64)
        taps = tuple(tuple(float(v) for v in row) for row in k2)
        kh, kw = k2.shape

    # --- negative pads crop the input (rare); positive pads fused in-kernel ---
    ch0, ch1 = max(-pad0, 0), max(-pad1, 0)
    if ch0 or ch1:
        x = x[:, :, ch0:h - ch1, ch0:w - ch1]
    hc, wc = x.shape[2], x.shape[3]
    p0, p1 = max(pad0, 0), max(pad1, 0)
    hp, wp = hc + p0 + p1, wc + p0 + p1
    ho, wo = hp - kh + 1, wp - kw + 1
    assert ho > 0 and wo > 0, "Blur output would be empty"

    # --- free view: NCHW -> (N*C, H, W); channels on the leading axis ---
    nc = n * c
    x_flat = x.reshape(nc, hc, wc)

    # --- channel-block sizing against a generation-aware VMEM budget ---
    in_b = jnp.dtype(in_dt).itemsize
    sub = max(8, 32 // max(in_b, 1))                 # sublane packing per dtype
    r = lambda v, m: ((v + m - 1) // m) * m
    per_c = (2 * r(hc, sub) * r(wc, 128) * in_b      # double-buffered input block
             + 2 * r(ho, sub) * r(wo, 128) * in_b    # double-buffered output block
             + r(hp, sub) * r(wp, 128) * in_b        # padded scratch (input dtype)
             + r(ho, 8) * r(wp, 128) * 4             # vertical-pass f32 scratch
             + r(ho, 8) * r(wo, 128) * 4)            # headroom for the output value
    vmem_cap = _vmem_capacity_bytes()
    budget = int(0.4 * vmem_cap)
    cap = max(1, budget // max(per_c, 1))
    if nc >= 2:                                      # >=2 blocks: v7x megacore + pipelining
        cap = min(cap, nc // 2)
    cap = max(1, min(cap, nc))
    c_blk = 1
    for d in range(cap, 0, -1):                      # largest divisor of nc <= cap:
        if nc % d == 0:                              # no ragged block, no channel pad in HBM
            c_blk = d
            break
    # TODO(synk): add spatial (H) tiling with halos for extreme resolutions where
    # even a single-channel padded plane would not fit in the VMEM budget.

    if separable:
        kern = functools.partial(_blur_sep_kernel, taps_y=taps_y, taps_x=taps_x,
                                 p0=p0, p1=p1, hc=hc, wc=wc, hp=hp, wp=wp,
                                 ho=ho, wo=wo)
        scratch = [pltpu.VMEM((c_blk, hp, wp), in_dt),
                   pltpu.VMEM((c_blk, ho, wp), jnp.float32)]
    else:
        kern = functools.partial(_blur_2d_kernel, taps=taps,
                                 p0=p0, p1=p1, hc=hc, wc=wc, hp=hp, wp=wp,
                                 ho=ho, wo=wo)
        scratch = [pltpu.VMEM((c_blk, hp, wp), in_dt)]

    out_flat = pl.pallas_call(
        kern,
        out_shape=jax.ShapeDtypeStruct((nc, ho, wo), in_dt),
        grid=(nc // c_blk,),
        in_specs=[pl.BlockSpec((c_blk, hc, wc), lambda i: (i, 0, 0))],
        out_specs=pl.BlockSpec((c_blk, ho, wo), lambda i: (i, 0, 0)),
        scratch_shapes=scratch,
        compiler_params=pltpu.CompilerParams(
            dimension_semantics=("parallel",),
            vmem_limit_bytes=int(0.6 * vmem_cap)),
    )(x_flat)

    return out_flat.reshape(n, c, ho, wo)


# ---------------------------------------------------------------------------
# pure-JAX reference (lax depthwise conv matching upfirdn2d semantics)
# ---------------------------------------------------------------------------
def _make_kernel_ref(k):
    k = jnp.asarray(k, dtype=jnp.float32)
    if k.ndim == 1:
        k = k[None, :] * k[:, None]
    return k / jnp.sum(k)


def blur_reference(x, kernel, pad, upsample_factor=1):
    k = _make_kernel_ref(kernel)
    if upsample_factor > 1:
        k = k * (upsample_factor ** 2)
    pad0, pad1 = int(pad[0]), int(pad[1])
    n, c, h, w = x.shape
    xp = jnp.pad(
        x.astype(jnp.float32),
        ((0, 0), (0, 0),
         (max(pad0, 0), max(pad1, 0)),
         (max(pad0, 0), max(pad1, 0))),
    )
    xp = xp[:, :,
            max(-pad0, 0): xp.shape[2] - max(-pad1, 0),
            max(-pad0, 0): xp.shape[3] - max(-pad1, 0)]
    nc = n * c
    xf = xp.reshape(nc, 1, xp.shape[2], xp.shape[3])
    wgt = jnp.flip(k, axis=(0, 1))[None, None, :, :]
    y = jax.lax.conv_general_dilated(
        xf, wgt, window_strides=(1, 1), padding="VALID",
        dimension_numbers=("NCHW", "OIHW", "NCHW"))
    return y.reshape(n, c, y.shape[2], y.shape[3]).astype(x.dtype)


if __name__ == "__main__":
    key = jax.random.PRNGKey(0)
    # Small NCHW input consistent with the module.
    x = jax.random.normal(key, (2, 4, 16, 16), dtype=jnp.float32)

    # Typical StyleGAN2 blur config: 1-D kernel [1,3,3,1], pad (2,1) -> separable path.
    out = jax.block_until_ready(blur(x, (1, 3, 3, 1), (2, 1)))
    ref = jax.block_until_ready(blur_reference(x, (1, 3, 3, 1), (2, 1)))
    np.testing.assert_allclose(np.asarray(out), np.asarray(ref), rtol=1e-5, atol=1e-5)

    # Non-separable (2-D kernel) path + upsample_factor > 1.
    k2d = np.outer(np.array([1.0, 2.0, 1.0]), np.array([1.0, 2.0, 1.0]))
    out2 = jax.block_until_ready(blur(x, k2d, (1, 1), upsample_factor=2))
    ref2 = jax.block_until_ready(blur_reference(x, k2d, (1, 1), upsample_factor=2))
    np.testing.assert_allclose(np.asarray(out2), np.asarray(ref2), rtol=1e-5, atol=1e-5)

    # bf16 I/O, odd channel count (c_blk=1 path), non-128 widths (masked lane stores).
    xb = jax.random.normal(jax.random.PRNGKey(1), (1, 3, 24, 40), dtype=jnp.bfloat16)
    out3 = jax.block_until_ready(blur(xb, (1, 3, 3, 1), (1, 2)))
    ref3 = jax.block_until_ready(blur_reference(xb, (1, 3, 3, 1), (1, 2)))
    np.testing.assert_allclose(np.asarray(out3, dtype=np.float32),
                               np.asarray(ref3, dtype=np.float32),
                               rtol=3e-2, atol=3e-2)

    print("KERNEL_OK")
</pallas_src>

<mosaic_0001>
module attributes {stable_mosaic.version = 11 : i64} {
  func.func @_blur_sep_kernel(%arg0: i32, %arg1: memref<4x16x16xf32, #tpu.memory_space<vmem>>, %arg2: memref<4x16x16xf32, #tpu.memory_space<vmem>>, %arg3: memref<4x19x19xf32, #tpu.memory_space<vmem>>, %arg4: memref<4x16x19xf32, #tpu.memory_space<vmem>>) attributes {dimension_semantics = [#tpu.dimension_semantics<parallel>], iteration_bounds = array<i64: 2>, scalar_prefetch = 0 : i64, scratch_operands = 2 : i64, tpu.core_type = #tpu.core_type<tc>, window_params = [{transform_indices = @transform_0, window_bounds = array<i64: 4, 16, 16>}, {transform_indices = @transform_1, window_bounds = array<i64: 4, 16, 16>}]} {
    %cst = arith.constant 0.000000e+00 : f32
    %0 = vector.broadcast %cst : f32 to vector<4x2x19xf32>
    %c0 = arith.constant 0 : index
    %c0_0 = arith.constant 0 : index
    %c0_1 = arith.constant 0 : index
    %1 = vector.load %arg3[%c0, %c0_0, %c0_1] : memref<4x19x19xf32, #tpu.memory_space<vmem>>, vector<4x2x19xf32>
    tpu.vector_store %arg3[%c0, %c0_0, %c0_1], %0 {strides = array<i32>} : memref<4x19x19xf32, #tpu.memory_space<vmem>>, vector<4x2x19xf32>,
    %cst_2 = arith.constant 0.000000e+00 : f32
    %2 = vector.broadcast %cst_2 : f32 to vector<4x19x2xf32>
    %c0_3 = arith.constant 0 : index
    %c0_4 = arith.constant 0 : index
    %c0_5 = arith.constant 0 : index
    %3 = vector.load %arg3[%c0_3, %c0_4, %c0_5] : memref<4x19x19xf32, #tpu.memory_space<vmem>>, vector<4x19x2xf32>
    tpu.vector_store %arg3[%c0_3, %c0_4, %c0_5], %2 {strides = array<i32>} : memref<4x19x19xf32, #tpu.memory_space<vmem>>, vector<4x19x2xf32>,
    %cst_6 = arith.constant 0.000000e+00 : f32
    %4 = vector.broadcast %cst_6 : f32 to vector<4x1x19xf32>
    %c0_7 = arith.constant 0 : index
    %c18 = arith.constant 18 : index
    %c0_8 = arith.constant 0 : index
    %5 = vector.load %arg3[%c0_7, %c18, %c0_8] : memref<4x19x19xf32, #tpu.memory_space<vmem>>, vector<4x1x19xf32>
    tpu.vector_store %arg3[%c0_7, %c18, %c0_8], %4 {strides = array<i32>} : memref<4x19x19xf32, #tpu.memory_space<vmem>>, vector<4x1x19xf32>,
    %cst_9 = arith.constant 0.000000e+00 : f32
    %6 = vector.broadcast %cst_9 : f32 to vector<4x19x1xf32>
    %c0_10 = arith.constant 0 : index
    %c0_11 = arith.constant 0 : index
    %c18_12 = arith.constant 18 : index
    %7 = vector.load %arg3[%c0_10, %c0_11, %c18_12] : memref<4x19x19xf32, #tpu.memory_space<vmem>>, vector<4x19x1xf32>
    tpu.vector_store %arg3[%c0_10, %c0_11, %c18_12], %6 {strides = array<i32>} : memref<4x19x19xf32, #tpu.memory_space<vmem>>, vector<4x19x1xf32>,
    %c0_13 = arith.constant 0 : index
    %c0_14 = arith.constant 0 : index
    %c0_15 = arith.constant 0 : index
    %8 = vector.load %arg1[%c0_13, %c0_14, %c0_15] : memref<4x16x16xf32, #tpu.memory_space<vmem>>, vector<4x16x16xf32>
    %c0_16 = arith.constant 0 : index
    %c2 = arith.constant 2 : index
    %c2_17 = arith.constant 2 : index
    %9 = vector.load %arg3[%c0_16, %c2, %c2_17] : memref<4x19x19xf32, #tpu.memory_space<vmem>>, vector<4x16x16xf32>
    tpu.vector_store %arg3[%c0_16, %c2, %c2_17], %8 {strides = array<i32>} : memref<4x19x19xf32, #tpu.memory_space<vmem>>, vector<4x16x16xf32>,
    %c0_18 = arith.constant 0 : index
    %c0_19 = arith.constant 0 : index
    %c0_20 = arith.constant 0 : index
    %10 = vector.load %arg3[%c0_18, %c0_19, %c0_20] : memref<4x19x19xf32, #tpu.memory_space<vmem>>, vector<4x16x19xf32>
    %cst_21 = arith.constant 1.250000e-01 : f32
    %11 = vector.broadcast %cst_21 : f32 to vector<4x16x19xf32>
    %12 = arith.mulf %10, %11 : vector<4x16x19xf32>
    %c0_22 = arith.constant 0 : index
    %c1 = arith.constant 1 : index
    %c0_23 = arith.constant 0 : index
    %13 = vector.load %arg3[%c0_22, %c1, %c0_23] : memref<4x19x19xf32, #tpu.memory_space<vmem>>, vector<4x16x19xf32>
    %cst_24 = arith.constant 3.750000e-01 : f32
    %14 = vector.broadcast %cst_24 : f32 to vector<4x16x19xf32>
    %15 = arith.mulf %13, %14 : vector<4x16x19xf32>
    %16 = arith.addf %12, %15 : vector<4x16x19xf32>
    %c0_25 = arith.constant 0 : index
    %c2_26 = arith.constant 2 : index
    %c0_27 = arith.constant 0 : index
    %17 = vector.load %arg3[%c0_25, %c2_26, %c0_27] : memref<4x19x19xf32, #tpu.memory_space<vmem>>, vector<4x16x19xf32>
    %cst_28 = arith.constant 3.750000e-01 : f32
    %18 = vector.broadcast %cst_28 : f32 to vector<4x16x19xf32>
    %19 = arith.mulf %17, %18 : vector<4x16x19xf32>
    %20 = arith.addf %16, %19 : vector<4x16x19xf32>
    %c0_29 = arith.constant 0 : index
    %c3 = arith.constant 3 : index
    %c0_30 = arith.constant 0 : index
    %21 = vector.load %arg3[%c0_29, %c3, %c0_30] : memref<4x19x19xf32, #tpu.memory_space<vmem>>, vector<4x16x19xf32>
    %cst_31 = arith.constant 1.250000e-01 : f32
    %22 = vector.broadcast %cst_31 : f32 to vector<4x16x19xf32>
    %23 = arith.mulf %21, %22 : vector<4x16x19xf32>
    %24 = arith.addf %20, %23 : vector<4x16x19xf32>
    %c0_32 = arith.constant 0 : index
    %c0_33 = arith.constant 0 : index
    %c0_34 = arith.constant 0 : index
    %25 = vector.load %arg4[%c0_32, %c0_33, %c0_34] : memref<4x16x19xf32, #tpu.memory_space<vmem>>, vector<4x16x19xf32>
    tpu.vector_store %arg4[%c0_32, %c0_33, %c0_34], %24 {strides = array<i32>} : memref<4x16x19xf32, #tpu.memory_space<vmem>>, vector<4x16x19xf32>,
    %c0_35 = arith.constant 0 : index
    %c0_36 = arith.constant 0 : index
    %c0_37 = arith.constant 0 : index
    %26 = vector.load %arg4[%c0_35, %c0_36, %c0_37] : memref<4x16x19xf32, #tpu.memory_space<vmem>>, vector<4x16x16xf32>
    %cst_38 = arith.constant 1.250000e-01 : f32
    %27 = vector.broadcast %cst_38 : f32 to vector<4x16x16xf32>
    %28 = arith.mulf %26, %27 : vector<4x16x16xf32>
    %c0_39 = arith.constant 0 : index
    %c0_40 = arith.constant 0 : index
    %c1_41 = arith.constant 1 : index
    %29 = vector.load %arg4[%c0_39, %c0_40, %c1_41] : memref<4x16x19xf32, #tpu.memory_space<vmem>>, vector<4x16x16xf32>
    %cst_42 = arith.constant 3.750000e-01 : f32
    %30 = vector.broadcast %cst_42 : f32 to vector<4x16x16xf32>
    %31 = arith.mulf %29, %30 : vector<4x16x16xf32>
    %32 = arith.addf %28, %31 : vector<4x16x16xf32>
    %c0_43 = arith.constant 0 : index
    %c0_44 = arith.constant 0 : index
    %c2_45 = arith.constant 2 : index
    %33 = vector.load %arg4[%c0_43, %c0_44, %c2_45] : memref<4x16x19xf32, #tpu.memory_space<vmem>>, vector<4x16x16xf32>
    %cst_46 = arith.constant 3.750000e-01 : f32
    %34 = vector.broadcast %cst_46 : f32 to vector<4x16x16xf32>
    %35 = arith.mulf %33, %34 : vector<4x16x16xf32>
    %36 = arith.addf %32, %35 : vector<4x16x16xf32>
    %c0_47 = arith.constant 0 : index
    %c0_48 = arith.constant 0 : index
    %c3_49 = arith.constant 3 : index
    %37 = vector.load %arg4[%c0_47, %c0_48, %c3_49] : memref<4x16x19xf32, #tpu.memory_space<vmem>>, vector<4x16x16xf32>
    %cst_50 = arith.constant 1.250000e-01 : f32
    %38 = vector.broadcast %cst_50 : f32 to vector<4x16x16xf32>
    %39 = arith.mulf %37, %38 : vector<4x16x16xf32>
    %40 = arith.addf %36, %39 : vector<4x16x16xf32>
    %c0_51 = arith.constant 0 : index
    %c0_52 = arith.constant 0 : index
    %c0_53 = arith.constant 0 : index
    %41 = vector.load %arg2[%c0_51, %c0_52, %c0_53] : memref<4x16x16xf32, #tpu.memory_space<vmem>>, vector<4x16x16xf32>
    tpu.vector_store %arg2[%c0_51, %c0_52, %c0_53], %40 {strides = array<i32>} : memref<4x16x16xf32, #tpu.memory_space<vmem>>, vector<4x16x16xf32>,
    return
  }
  func.func @transform_0(%arg0: i32) -> (i32, i32, i32) {
    %c0_i32 = arith.constant 0 : i32
    %c0_i32_0 = arith.constant 0 : i32
    %c0_i32_1 = arith.constant 0 : i32
    return %arg0, %c0_i32, %c0_i32_0 : i32, i32, i32
  }
  func.func @transform_1(%arg0: i32) -> (i32, i32, i32) {
    %c0_i32 = arith.constant 0 : i32
    %c0_i32_0 = arith.constant 0 : i32
    %c0_i32_1 = arith.constant 0 : i32
    return %arg0, %c0_i32, %c0_i32_0 : i32, i32, i32
  }
}

</mosaic_0001>

<llo_original>
// kernel: tpu_custom_call.1
$region0: #{tpu_custom_call.1}
  #allocation0 [shape = 'u32[]', space=smem, size = 0x4, offset = 0x4, fixed_abs, tag = 'smem constant byte address 0x4 - core index']
  #allocation1 [shape = 'u32[144,128]{1,0:T(1,128)}', space=vmem, size = 0x12000, scoped, tag = 'internal scratch']
  #allocation2 [shape = 'f32[4,19,19]{2,1,0:T(8,128)}', space=vmem, size = 0xc000, scoped, tag = 'scratch operand']
  #allocation3 [shape = 'f32[4,16,19]{2,1,0:T(8,128)}', space=vmem, size = 0x8000, scoped, tag = 'scratch operand']
  %s0 = inlined_call_operand.hbm [shape: f32[8,16,16], index: 0, kind: input, shape index: {}]
  %s1 = inlined_call_operand.hbm [shape: f32[8,16,16], index: 1, kind: output, shape index: {}]
  %s2 = sld [smem:[#allocation0]]
  $region41: #{tpu_custom_call.1} parent=0
    _
  %s4 = ssub.s32 1, %s2
  %s5 = scalar_select 0, %s4, %s2
  $region1: #{tpu_custom_call.1} parent=0
    #allocation4 [shape = 'u8[65536]{0}', space=vmem, size = 0x10000, scoped, tag = 'input window, operand 0']
    #allocation5 [shape = 's32[2]{0}', space=sflag, size = 0x8, scoped, tag = 'scoped memory for tpu_custom_call.1']
    #allocation6 [shape = 's32[2]{0}', space=sflag, size = 0x8, scoped, tag = 'scoped memory for tpu_custom_call.1']
    #allocation7 [shape = 'u8[65536]{0}', space=vmem, size = 0x10000, scoped, tag = 'output window, operand 0']
    %6 = vsyncpa [#allocation5], 0
    %s7 = scalar_lea.sflag [#allocation5], 1
    %8 = vsyncpa %s7, 0
    %9 = vsyncpa [#allocation6], 0
    %s10 = scalar_lea.sflag [#allocation6], 1
    %11 = vsyncpa %s10, 0
    loop: start=0, step=1, limit=4
    $region2: #{tpu_custom_call.1} parent=1 // loop_pre_header
      _
    $region3: #{tpu_custom_call.1} parent=1 // loop_header
      %s13 = sphi 0, %s17
      %p14 = scmp.ge.s32.totalorder %s13, 4
      %s23 = sphi 0, %s25
      %s26 = sphi 0, %s23
      %s27 = sphi 0, %s26
      %s43 = sphi 0, %s27
      %s49 = sphi 0, %s51
      %s52 = sphi 0, %s49
      %s53 = sphi 0, %s52
      %s69 = sphi 0, %s53
    $region4: #{tpu_custom_call.1} parent=1 // loop_header_branch
      %16 = sbr.rel (%p14) target = $region8
    $region5: #{tpu_custom_call.1} parent=1 // loop_body
      %s18 = ssub.s32 %s13, 1
      %s19 = ssub.s32 %s13, 2
      %s20 = sadd.s32 %s13, 1
      %s21 = ssub.s32 %s13, %s20
      %p22 = scmp.eq.s32.totalorder %s21, 0
      %s24 = sadd.s32 %s23, 1
      %s25 = scalar_select %p22, %s23, %s24
      %p28 = pneg %p22
      %p29 = scmp.eq.s32.totalorder %s13, 1
      %p30 = por %p28, %p29
      %p31 = scmp.ne.s32.totalorder %s23, %s26
      %p32 = scmp.eq.s32.totalorder %s13, 0
      %p33 = por %p31, %p32
      %p34 = scmp.ne.s32.totalorder %s23, %s26
      %p35 = scmp.eq.s32.totalorder %s18, 1
      %p36 = por %p34, %p35
      %p37 = scmp.ne.s32.totalorder %s26, %s27
      %p38 = scmp.eq.s32.totalorder %s18, 0
      %p39 = por %p37, %p38
      %p40 = scmp.ne.s32.totalorder %s26, %s27
      %p41 = scmp.eq.s32.totalorder %s19, 1
      %p42 = por %p40, %p41
      %p44 = scmp.ne.s32.totalorder %s27, %s43
      %p45 = scmp.eq.s32.totalorder %s19, 0
      %p46 = por %p44, %p45
      %s47 = ssub.s32 %s13, %s20
      %p48 = scmp.eq.s32.totalorder %s47, 0
      %s50 = sadd.s32 %s49, 1
      %s51 = scalar_select %p48, %s49, %s50
      %p54 = pneg %p48
      %p55 = scmp.eq.s32.totalorder %s13, 1
      %p56 = por %p54, %p55
      %p57 = scmp.ne.s32.totalorder %s49, %s52
      %p58 = scmp.eq.s32.totalorder %s13, 0
      %p59 = por %p57, %p58
      %p60 = scmp.ne.s32.totalorder %s49, %s52
      %p61 = scmp.eq.s32.totalorder %s18, 1
      %p62 = por %p60, %p61
      %p63 = scmp.ne.s32.totalorder %s52, %s53
      %p64 = scmp.eq.s32.totalorder %s18, 0
      %p65 = por %p63, %p64
      %p66 = scmp.ne.s32.totalorder %s52, %s53
      %p67 = scmp.eq.s32.totalorder %s19, 1
      %p68 = por %p66, %p67
      %p70 = scmp.ne.s32.totalorder %s53, %s69
      %p71 = scmp.eq.s32.totalorder %s19, 0
      %p72 = por %p70, %p71
      %p73 = scmp.le.s32.totalorder 1, %s13
      %p74 = scmp.lt.s32.totalorder %s13, 3
      %p75 = pnand %p73, %p74
      %p76 = pneg %p75
      // Predicated region
      $region9: #{tpu_custom_call.1} parent=5 // pred_check
        _
      $region10: #{tpu_custom_call.1} parent=5 // pred_check_branch
        %78 = sbr.rel (%p75) target = $region12
      $region11: #{tpu_custom_call.1} parent=5 // pred_region
        %s79 = ssub.s32 %s13, 1
      $region12: #{tpu_custom_call.1} parent=5 // pred_fallthru
        _
      %p80 = scmp.lt.s32.totalorder %s13, 2
      // Predicated region
      $region13: #{tpu_custom_call.1} parent=5 // pred_check
        %p81 = pneg %p80
      $region14: #{tpu_custom_call.1} parent=5 // pred_check_branch
        %83 = sbr.rel (%p81) target = $region16
      $region15: #{tpu_custom_call.1} parent=5 // pred_region
        // Predicated region
        $region17: #{tpu_custom_call.1} parent=15 // pred_check
          %p84 = pneg %p33
        $region18: #{tpu_custom_call.1} parent=15 // pred_check_branch
          %86 = sbr.rel (%p84) target = $region20
        $region19: #{tpu_custom_call.1} parent=15 // pred_region
          %s87 = sand.u32 %s23, 1
          %s88 = scalar_lea.sflag [#allocation5], %s87
          %s89 = sand.u32 %s23, 1
          %s90 = smul.addr %s89, 64
          %s91 = scalar_lea.vmem [#allocation4], %s90
          %s92 = smul.u32 4, %s13
          %s94 = ssub.s32 1024, 1024
          %95 = vsyncadd %s88, %s94
          %s96 = smul.addr %s92, 2
          %s97 = smul.addr %s96, 128
          %s98 = scalar_lea.hbm %s0, %s97
          %s99 = sshll.u32 %s91, 4
          %s100 = int_to_ptr.vmem [resolvable:$true] %s99
          %105 = dma.hbm_to_vmem [thread:$0]  %s98, 1024, %s100, %s88, 128, 128, 8
        $region20: #{tpu_custom_call.1} parent=15 // pred_fallthru
          _
      $region16: #{tpu_custom_call.1} parent=5 // pred_fallthru
        _
      %p106 = scmp.le.s32.totalorder 1, %s13
      %p107 = scmp.lt.s32.totalorder %s13, 3
      %p108 = pnand %p106, %p107
      %p109 = pneg %p108
      // Predicated region
      $region21: #{tpu_custom_call.1} parent=5 // pred_check
        _
      $region22: #{tpu_custom_call.1} parent=5 // pred_check_branch
        %111 = sbr.rel (%p108) target = $region24
      $region23: #{tpu_custom_call.1} parent=5 // pred_region
        %s112 = ssub.s32 %s13, 1
        %s113 = sand.u32 %s26, 1
        %s114 = scalar_lea.sflag [#allocation5], %s113
        %s115 = sand.u32 %s26, 1
        %s116 = smul.addr %s115, 64
        %s117 = scalar_lea.vmem [#allocation4], %s116
        // Predicated region
        $region25: #{tpu_custom_call.1} parent=23 // pred_check
          %p118 = pneg %p39
        $region26: #{tpu_custom_call.1} parent=23 // pred_check_branch
          %120 = sbr.rel (%p118) target = $region28
        $region27: #{tpu_custom_call.1} parent=23 // pred_region
          %121 = dma.done %s114, 1024
        $region28: #{tpu_custom_call.1} parent=23 // pred_fallthru
          _
        %s122 = sand.u32 %s26, 1
        %s123 = scalar_lea.sflag [#allocation5], %s122
        %s124 = sand.u32 %s26, 1
        %s125 = smul.addr %s124, 64
        %s126 = scalar_lea.vmem [#allocation4], %s125
        %p127 = pneg %p39
        %p128 = pneg %p36
        %p129 = pneg %p65
        %p130 = pneg %p62
        %s131 = sand.u32 %s52, 1
        %s132 = scalar_lea.sflag [#allocation6], %s131
        %s133 = sand.u32 %s52, 1
        %s134 = smul.addr %s133, 64
        %s135 = scalar_lea.vmem [#allocation7], %s134
        %s136 = smul.u32 4, %s18
        %s137 = smul.u32 4, %s18
        %vm138 = vcmask 148480
        %139 = vst.msk [vmem:[#allocation2] sm:$0x3] %vm138, 0.0
        %140 = vst.msk [vmem:[#allocation2 + $0x18] sm:$0x3] %vm138, 0.0
        %141 = vst.msk [vmem:[#allocation2 + $0x30] sm:$0x3] %vm138, 0.0
        %142 = vst.msk [vmem:[#allocation2 + $0x48] sm:$0x3] %vm138, 0.0
        %vm143 = vcmask 15360
        %144 = vst.msk [vmem:[#allocation2] sm:$0xff] %vm143, 0.0
        %145 = vst.msk [vmem:[#allocation2 + $0x8] sm:$0xff] %vm143, 0.0
        %vm146 = vcmask 10240
        %147 = vst.msk [vmem:[#allocation2 + $0x10] sm:$0x7] %vm146, 0.0
        %148 = vst.msk [vmem:[#allocation2 + $0x18] sm:$0xff] %vm143, 0.0
        %149 = vst.msk [vmem:[#allocation2 + $0x20] sm:$0xff] %vm143, 0.0
        %150 = vst.msk [vmem:[#allocation2 + $0x28] sm:$0x7] %vm146, 0.0
        %151 = vst.msk [vmem:[#allocation2 + $0x30] sm:$0xff] %vm143, 0.0
        %152 = vst.msk [vmem:[#allocation2 + $0x38] sm:$0xff] %vm143, 0.0
        %153 = vst.msk [vmem:[#allocation2 + $0x40] sm:$0x7] %vm146, 0.0
        %154 = vst.msk [vmem:[#allocation2 + $0x48] sm:$0xff] %vm143, 0.0
        %155 = vst.msk [vmem:[#allocation2 + $0x50] sm:$0xff] %vm143, 0.0
        %156 = vst.msk [vmem:[#allocation2 + $0x58] sm:$0x7] %vm146, 0.0
        %vm157 = vcmask 147456
        %158 = vst.msk [vmem:[#allocation2 + $0x12] sm:$0x1] %vm157, 0.0
        %159 = vst.msk [vmem:[#allocation2 + $0x2a] sm:$0x1] %vm157, 0.0
        %160 = vst.msk [vmem:[#allocation2 + $0x42] sm:$0x1] %vm157, 0.0
        %161 = vst.msk [vmem:[#allocation2 + $0x5a] sm:$0x1] %vm157, 0.0
        %vm162 = vcmask 154768
        %163 = vst.msk [vmem:[#allocation2] sm:$0xff] %vm162, 0.0
        %164 = vst.msk [vmem:[#allocation2 + $0x8] sm:$0xff] %vm162, 0.0
        %vm165 = vcmask 149648
        %166 = vst.msk [vmem:[#allocation2 + $0x10] sm:$0x7] %vm165, 0.0
        %167 = vst.msk [vmem:[#allocation2 + $0x18] sm:$0xff] %vm162, 0.0
        %168 = vst.msk [vmem:[#allocation2 + $0x20] sm:$0xff] %vm162, 0.0
        %169 = vst.msk [vmem:[#allocation2 + $0x28] sm:$0x7] %vm165, 0.0
        %170 = vst.msk [vmem:[#allocation2 + $0x30] sm:$0xff] %vm162, 0.0
        %171 = vst.msk [vmem:[#allocation2 + $0x38] sm:$0xff] %vm162, 0.0
        %172 = vst.msk [vmem:[#allocation2 + $0x40] sm:$0x7] %vm165, 0.0
        %173 = vst.msk [vmem:[#allocation2 + $0x48] sm:$0xff] %vm162, 0.0
        %174 = vst.msk [vmem:[#allocation2 + $0x50] sm:$0xff] %vm162, 0.0
        %175 = vst.msk [vmem:[#allocation2 + $0x58] sm:$0x7] %vm165, 0.0
        %v176 = vld [vmem:[%s117] sm:$0xff]
        %v177 = vld [vmem:[%s117 + $0x8] sm:$0xff]
        %v178 = vld [vmem:[%s117 + $0x10] sm:$0xff]
        %v179 = vld [vmem:[%s117 + $0x18] sm:$0xff]
        %v180 = vld [vmem:[%s117 + $0x20] sm:$0xff]
        %v181 = vld [vmem:[%s117 + $0x28] sm:$0xff]
        %v182 = vld [vmem:[%s117 + $0x30] sm:$0xff]
        %v183 = vld [vmem:[%s117 + $0x38] sm:$0xff]
        %192 = vrot.lane.b32.xlu0 %v176, 2
        %v193 = vpop.permute.xlu0 %192
        %194 = vrot.lane.b32.xlu0 %v177, 2
        %v195 = vpop.permute.xlu0 %194
        %196 = vrot.lane.b32.xlu0 %v178, 2
        %v197 = vpop.permute.xlu0 %196
        %198 = vrot.lane.b32.xlu0 %v179, 2
        %v199 = vpop.permute.xlu0 %198
        %200 = vrot.lane.b32.xlu0 %v180, 2
        %v201 = vpop.permute.xlu0 %200
        %202 = vrot.lane.b32.xlu0 %v181, 2
        %v203 = vpop.permute.xlu0 %202
        %204 = vrot.lane.b32.xlu0 %v182, 2
        %v205 = vpop.permute.xlu0 %204
        %206 = vrot.lane.b32.xlu0 %v183, 2
        %v207 = vpop.permute.xlu0 %206
        %vm216 = vcmask 146448
        %217 = vst.msk [vmem:[#allocation2 + $0x2] sm:$0xff] %vm216, %v193
        %218 = vst.msk [vmem:[#allocation2 + $0xa] sm:$0xff] %vm216, %v195
        %219 = vst.msk [vmem:[#allocation2 + $0x1a] sm:$0xff] %vm216, %v197
        %220 = vst.msk [vmem:[#allocation2 + $0x22] sm:$0xff] %vm216, %v199
        %221 = vst.msk [vmem:[#allocation2 + $0x32] sm:$0xff] %vm216, %v201
        %222 = vst.msk [vmem:[#allocation2 + $0x3a] sm:$0xff] %vm216, %v203
        %223 = vst.msk [vmem:[#allocation2 + $0x4a] sm:$0xff] %vm216, %v205
        %224 = vst.msk [vmem:[#allocation2 + $0x52] sm:$0xff] %vm216, %v207
        %v225 = vld [vmem:[#allocation2] sm:$0xff]
        %v226 = vld [vmem:[#allocation2 + $0x8] sm:$0xff]
        %v227 = vld [vmem:[#allocation2 + $0x18] sm:$0xff]
        %v228 = vld [vmem:[#allocation2 + $0x20] sm:$0xff]
        %v229 = vld [vmem:[#allocation2 + $0x30] sm:$0xff]
        %v230 = vld [vmem:[#allocation2 + $0x38] sm:$0xff]
        %v231 = vld [vmem:[#allocation2 + $0x48] sm:$0xff]
        %v232 = vld [vmem:[#allocation2 + $0x50] sm:$0xff]
        %v233 = vmul.f32 %v225, 0.125
        %v234 = vmul.f32 %v226, 0.125
        %v235 = vmul.f32 %v227, 0.125
        %v236 = vmul.f32 %v228, 0.125
        %v237 = vmul.f32 %v229, 0.125
        %v238 = vmul.f32 %v230, 0.125
        %v239 = vmul.f32 %v231, 0.125
        %v240 = vmul.f32 %v232, 0.125
        %v241 = vld [vmem:[#allocation2 + $0x1] sm:$0xff]
        %v242 = vld [vmem:[#allocation2 + $0x9] sm:$0xff]
        %v243 = vld [vmem:[#allocation2 + $0x19] sm:$0xff]
        %v244 = vld [vmem:[#allocation2 + $0x21] sm:$0xff]
        %v245 = vld [vmem:[#allocation2 + $0x31] sm:$0xff]
        %v246 = vld [vmem:[#allocation2 + $0x39] sm:$0xff]
        %v247 = vld [vmem:[#allocation2 + $0x49] sm:$0xff]
        %v248 = vld [vmem:[#allocation2 + $0x51] sm:$0xff]
        %v249 = vmul.f32 %v241, 0.375
        %v250 = vmul.f32 %v242, 0.375
        %v251 = vmul.f32 %v243, 0.375
        %v252 = vmul.f32 %v244, 0.375
        %v253 = vmul.f32 %v245, 0.375
        %v254 = vmul.f32 %v246, 0.375
        %v255 = vmul.f32 %v247, 0.375
        %v256 = vmul.f32 %v248, 0.375
        %v257 = vadd.f32 %v233, %v249
        %v258 = vadd.f32 %v234, %v250
        %v259 = vadd.f32 %v235, %v251
        %v260 = vadd.f32 %v236, %v252
        %v261 = vadd.f32 %v237, %v253
        %v262 = vadd.f32 %v238, %v254
        %v263 = vadd.f32 %v239, %v255
        %v264 = vadd.f32 %v240, %v256
        %v265 = vld [vmem:[#allocation2 + $0x2] sm:$0xff]
        %v266 = vld [vmem:[#allocation2 + $0xa] sm:$0xff]
        %v267 = vld [vmem:[#allocation2 + $0x1a] sm:$0xff]
        %v268 = vld [vmem:[#allocation2 + $0x22] sm:$0xff]
        %v269 = vld [vmem:[#allocation2 + $0x32] sm:$0xff]
        %v270 = vld [vmem:[#allocation2 + $0x3a] sm:$0xff]
        %v271 = vld [vmem:[#allocation2 + $0x4a] sm:$0xff]
        %v272 = vld [vmem:[#allocation2 + $0x52] sm:$0xff]
        %v273 = vmul.f32 %v265, 0.375
        %v274 = vmul.f32 %v266, 0.375
        %v275 = vmul.f32 %v267, 0.375
        %v276 = vmul.f32 %v268, 0.375
        %v277 = vmul.f32 %v269, 0.375
        %v278 = vmul.f32 %v270, 0.375
        %v279 = vmul.f32 %v271, 0.375
        %v280 = vmul.f32 %v272, 0.375
        %v281 = vadd.f32 %v257, %v273
        %v282 = vadd.f32 %v258, %v274
        %v283 = vadd.f32 %v259, %v275
        %v284 = vadd.f32 %v260, %v276
        %v285 = vadd.f32 %v261, %v277
        %v286 = vadd.f32 %v262, %v278
        %v287 = vadd.f32 %v263, %v279
        %v288 = vadd.f32 %v264, %v280
        %v289 = vld [vmem:[#allocation2 + $0x3] sm:$0xff]
        %v290 = vld [vmem:[#allocation2 + $0xb] sm:$0xff]
        %v291 = vld [vmem:[#allocation2 + $0x1b] sm:$0xff]
        %v292 = vld [vmem:[#allocation2 + $0x23] sm:$0xff]
        %v293 = vld [vmem:[#allocation2 + $0x33] sm:$0xff]
        %v294 = vld [vmem:[#allocation2 + $0x3b] sm:$0xff]
        %v295 = vld [vmem:[#allocation2 + $0x4b] sm:$0xff]
        %v296 = vld [vmem:[#allocation2 + $0x53] sm:$0xff]
        %v297 = vmul.f32 %v289, 0.125
        %v298 = vmul.f32 %v290, 0.125
        %v299 = vmul.f32 %v291, 0.125
        %v300 = vmul.f32 %v292, 0.125
        %v301 = vmul.f32 %v293, 0.125
        %v302 = vmul.f32 %v294, 0.125
        %v303 = vmul.f32 %v295, 0.125
        %v304 = vmul.f32 %v296, 0.125
        %v305 = vadd.f32 %v281, %v297
        %v306 = vadd.f32 %v282, %v298
        %v307 = vadd.f32 %v283, %v299
        %v308 = vadd.f32 %v284, %v300
        %v309 = vadd.f32 %v285, %v301
        %v310 = vadd.f32 %v286, %v302
        %v311 = vadd.f32 %v287, %v303
        %v312 = vadd.f32 %v288, %v304
        %vm313 = vcmask 154624
        %314 = vst.msk [vmem:[#allocation3] sm:$0xff] %vm313, %v305
        %315 = vst.msk [vmem:[#allocation3 + $0x8] sm:$0xff] %vm313, %v306
        %316 = vst.msk [vmem:[#allocation3 + $0x10] sm:$0xff] %vm313, %v307
        %317 = vst.msk [vmem:[#allocation3 + $0x18] sm:$0xff] %vm313, %v308
        %318 = vst.msk [vmem:[#allocation3 + $0x20] sm:$0xff] %vm313, %v309
        %319 = vst.msk [vmem:[#allocation3 + $0x28] sm:$0xff] %vm313, %v310
        %320 = vst.msk [vmem:[#allocation3 + $0x30] sm:$0xff] %vm313, %v311
        %321 = vst.msk [vmem:[#allocation3 + $0x38] sm:$0xff] %vm313, %v312
        %v322 = vld [vmem:[#allocation3] sm:$0xff]
        %v323 = vld [vmem:[#allocation3 + $0x8] sm:$0xff]
        %v324 = vld [vmem:[#allocation3 + $0x10] sm:$0xff]
        %v325 = vld [vmem:[#allocation3 + $0x18] sm:$0xff]
        %v326 = vld [vmem:[#allocation3 + $0x20] sm:$0xff]
        %v327 = vld [vmem:[#allocation3 + $0x28] sm:$0xff]
        %v328 = vld [vmem:[#allocation3 + $0x30] sm:$0xff]
        %v329 = vld [vmem:[#allocation3 + $0x38] sm:$0xff]
        %v330 = vmul.f32 %v322, 0.125
        %v331 = vmul.f32 %v323, 0.125
        %v332 = vmul.f32 %v324, 0.125
        %v333 = vmul.f32 %v325, 0.125
        %v334 = vmul.f32 %v326, 0.125
        %v335 = vmul.f32 %v327, 0.125
        %v336 = vmul.f32 %v328, 0.125
        %v337 = vmul.f32 %v329, 0.125
        %v338 = vmul.f32 %v322, 0.375
        %v339 = vmul.f32 %v323, 0.375
        %v340 = vmul.f32 %v324, 0.375
        %v341 = vmul.f32 %v325, 0.375
        %v342 = vmul.f32 %v326, 0.375
        %v343 = vmul.f32 %v327, 0.375
        %v344 = vmul.f32 %v328, 0.375
        %v345 = vmul.f32 %v329, 0.375
        %354 = vrot.lane.b32.xlu0 %v338, 127
        %v355 = vpop.permute.xlu0 %354
        %356 = vrot.lane.b32.xlu0 %v339, 127
        %v357 = vpop.permute.xlu0 %356
        %358 = vrot.lane.b32.xlu0 %v340, 127
        %v359 = vpop.permute.xlu0 %358
        %360 = vrot.lane.b32.xlu0 %v341, 127
        %v361 = vpop.permute.xlu0 %360
        %362 = vrot.lane.b32.xlu0 %v342, 127
        %v363 = vpop.permute.xlu0 %362
        %364 = vrot.lane.b32.xlu0 %v343, 127
        %v365 = vpop.permute.xlu0 %364
        %366 = vrot.lane.b32.xlu0 %v344, 127
        %v367 = vpop.permute.xlu0 %366
        %368 = vrot.lane.b32.xlu0 %v345, 127
        %v369 = vpop.permute.xlu0 %368
        %v378 = vadd.f32 %v330, %v355
        %v379 = vadd.f32 %v331, %v357
        %v380 = vadd.f32 %v332, %v359
        %v381 = vadd.f32 %v333, %v361
        %v382 = vadd.f32 %v334, %v363
        %v383 = vadd.f32 %v335, %v365
        %v384 = vadd.f32 %v336, %v367
        %v385 = vadd.f32 %v337, %v369
        %386 = vrot.lane.b32.xlu0 %v338, 126
        %v387 = vpop.permute.xlu0 %386
        %388 = vrot.lane.b32.xlu0 %v339, 126
        %v389 = vpop.permute.xlu0 %388
        %390 = vrot.lane.b32.xlu0 %v340, 126
        %v391 = vpop.permute.xlu0 %390
        %392 = vrot.lane.b32.xlu0 %v341, 126
        %v393 = vpop.permute.xlu0 %392
        %394 = vrot.lane.b32.xlu0 %v342, 126
        %v395 = vpop.permute.xlu0 %394
        %396 = vrot.lane.b32.xlu0 %v343, 126
        %v397 = vpop.permute.xlu0 %396
        %398 = vrot.lane.b32.xlu0 %v344, 126
        %v399 = vpop.permute.xlu0 %398
        %400 = vrot.lane.b32.xlu0 %v345, 126
        %v401 = vpop.permute.xlu0 %400
        %v410 = vadd.f32 %v378, %v387
        %v411 = vadd.f32 %v379, %v389
        %v412 = vadd.f32 %v380, %v391
        %v413 = vadd.f32 %v381, %v393
        %v414 = vadd.f32 %v382, %v395
        %v415 = vadd.f32 %v383, %v397
        %v416 = vadd.f32 %v384, %v399
        %v417 = vadd.f32 %v385, %v401
        %426 = vrot.lane.b32.xlu0 %v330, 125
        %v427 = vpop.permute.xlu0 %426
        %428 = vrot.lane.b32.xlu0 %v331, 125
        %v429 = vpop.permute.xlu0 %428
        %430 = vrot.lane.b32.xlu0 %v332, 125
        %v431 = vpop.permute.xlu0 %430
        %432 = vrot.lane.b32.xlu0 %v333, 125
        %v433 = vpop.permute.xlu0 %432
        %434 = vrot.lane.b32.xlu0 %v334, 125
        %v435 = vpop.permute.xlu0 %434
        %436 = vrot.lane.b32.xlu0 %v335, 125
        %v437 = vpop.permute.xlu0 %436
        %438 = vrot.lane.b32.xlu0 %v336, 125
        %v439 = vpop.permute.xlu0 %438
        %440 = vrot.lane.b32.xlu0 %v337, 125
        %v441 = vpop.permute.xlu0 %440
        %v450 = vadd.f32 %v410, %v427
        %v451 = vadd.f32 %v411, %v429
        %v452 = vadd.f32 %v412, %v431
        %v453 = vadd.f32 %v413, %v433
        %v454 = vadd.f32 %v414, %v435
        %v455 = vadd.f32 %v415, %v437
        %v456 = vadd.f32 %v416, %v439
        %v457 = vadd.f32 %v417, %v441
        %vm458 = vcmask 130048
        %459 = vst.msk [vmem:[%s135] sm:$0xff] %vm458, %v450
        %460 = vst.msk [vmem:[%s135 + $0x8] sm:$0xff] %vm458, %v451
        %461 = vst.msk [vmem:[%s135 + $0x10] sm:$0xff] %vm458, %v452
        %462 = vst.msk [vmem:[%s135 + $0x18] sm:$0xff] %vm458, %v453
        %463 = vst.msk [vmem:[%s135 + $0x20] sm:$0xff] %vm458, %v454
        %464 = vst.msk [vmem:[%s135 + $0x28] sm:$0xff] %vm458, %v455
        %465 = vst.msk [vmem:[%s135 + $0x30] sm:$0xff] %vm458, %v456
        %466 = vst.msk [vmem:[%s135 + $0x38] sm:$0xff] %vm458, %v457
        %s467 = sand.u32 %s52, 1
        %s468 = scalar_lea.sflag [#allocation6], %s467
        %s469 = sand.u32 %s52, 1
        %s470 = smul.addr %s469, 64
        %s471 = scalar_lea.vmem [#allocation7], %s470
        // Predicated region
        $region29: #{tpu_custom_call.1} parent=23 // pred_check
          %p472 = pneg %p62
        $region30: #{tpu_custom_call.1} parent=23 // pred_check_branch
          %474 = sbr.rel (%p472) target = $region32
        $region31: #{tpu_custom_call.1} parent=23 // pred_region
          %s475 = smul.u32 4, %s18
          %s477 = ssub.s32 1024, 1024
          %478 = vsyncadd %s468, %s477
          %s479 = smul.addr %s475, 2
          %s480 = smul.addr %s479, 128
          %s481 = scalar_lea.hbm %s1, %s480
          %s482 = sshll.u32 %s471, 4
          %s483 = int_to_ptr.vmem [resolvable:$true] %s482
          %488 = dma.vmem_to_hbm [thread:$0]  %s483, 1024, %s481, %s468, 128, 128, 8
        $region32: #{tpu_custom_call.1} parent=23 // pred_fallthru
          _
      $region24: #{tpu_custom_call.1} parent=5 // pred_fallthru
        _
      %p489 = scmp.le.s32.totalorder 2, %s13
      // Predicated region
      $region33: #{tpu_custom_call.1} parent=5 // pred_check
        %p490 = pneg %p489
      $region34: #{tpu_custom_call.1} parent=5 // pred_check_branch
        %492 = sbr.rel (%p490) target = $region36
      $region35: #{tpu_custom_call.1} parent=5 // pred_region
        %s493 = ssub.s32 %s13, 2
        // Predicated region
        $region37: #{tpu_custom_call.1} parent=35 // pred_check
          %p494 = pneg %p68
        $region38: #{tpu_custom_call.1} parent=35 // pred_check_branch
          %496 = sbr.rel (%p494) target = $region40
        $region39: #{tpu_custom_call.1} parent=35 // pred_region
          %s497 = sand.u32 %s53, 1
          %s498 = scalar_lea.sflag [#allocation6], %s497
          %s499 = sand.u32 %s53, 1
          %s500 = smul.addr %s499, 64
          %s501 = scalar_lea.vmem [#allocation7], %s500
          %502 = dma.done %s498, 1024
        $region40: #{tpu_custom_call.1} parent=35 // pred_fallthru
          _
      $region36: #{tpu_custom_call.1} parent=5 // pred_fallthru
        _
    $region6: #{tpu_custom_call.1} parent=1 // loop_footer
      %s17 = sadd.s32 1, %s13
    $region7: #{tpu_custom_call.1} parent=1 // loop_footer_branch
      %12 = sbr.rel target = $region3
    $region8: #{tpu_custom_call.1} parent=1 // loop_exit
      _
    %503 = vsyncpa [#allocation5], 1
    %s504 = scalar_lea.sflag [#allocation5], 1
    %505 = vsyncpa %s504, 1
    %506 = vsyncpa [#allocation6], 1
    %s507 = scalar_lea.sflag [#allocation6], 1
    %508 = vsyncpa %s507, 1

</llo_original>
